<compile_context>
chip_gen: v7x
topology: tpu7x:2x2x1
jax: 0.10.0
libtpu: 0.0.40
codegen_flags: <defaults>
</compile_context>

<pallas_src>
import numpy as np
import jax
import jax.numpy as jnp
from jax import lax
from jax.experimental import pallas as pl
from jax.experimental.pallas import tpu as pltpu

# Number of gather row-DMAs kept in flight simultaneously (power of two).
_NBUF = 8


def _emb_fix_kernel(ids_ref, off_ref, len_ref,     # scalar prefetch (SMEM)
                    w_hbm, vecs_hbm,               # inputs (HBM, pl.ANY)
                    out_ref,                       # output block (S, D) VMEM
                    vec_buf, gsem, vsem):          # scratch
    # ids_ref  : SMEM (B, S)      int32
    # off_ref  : SMEM (B, MAXF)   int32
    # len_ref  : SMEM (B, MAXF)   int32
    # w_hbm    : HBM  (V, D)      float32   (memory_space=pl.ANY)
    # vecs_hbm : HBM  (B, MAXF, MAXL, D) float32 (memory_space=pl.ANY)
    # out_ref  : VMEM (S, D)      float32   (leading batch dim squeezed)
    # vec_buf  : VMEM (MAXF, MAXL, D) float32
    # gsem     : DMA semaphores (_NBUF,)   (gather ring)
    # vsem     : DMA semaphores (MAXF,)    (fix-vec slabs)
    b = pl.program_id(0)
    S, D = out_ref.shape
    MAXF = off_ref.shape[1]
    MAXL = vec_buf.shape[1]

    def row_copy(s, tok, slot):
        # Identical descriptor used for both .start() and .wait().
        return pltpu.make_async_copy(
            w_hbm.at[pl.ds(tok, 1), :],
            out_ref.at[pl.ds(s, 1), :],
            gsem.at[slot])

    # ---- token-embedding gather: HBM row DMAs straight into out_ref ----
    for s in range(min(_NBUF, S)):                 # prime the ring (static)
        row_copy(s, ids_ref[b, s], s & (_NBUF - 1)).start()

    # Prefetch fix-vec slabs for active fixes only; overlaps with the gather.
    for f in range(MAXF):
        @pl.when(off_ref[b, f] >= 0)
        def _start_vec(f=f):
            pltpu.make_async_copy(vecs_hbm.at[b, f], vec_buf.at[f],
                                  vsem.at[f]).start()

    def gather_step(s, carry):
        slot = s & (_NBUF - 1)
        nxt = s + _NBUF
        # Scalar SMEM reads hoisted above the wait (sst->sld forwarding).
        tok_next = ids_ref[b, jnp.minimum(nxt, S - 1)]
        tok_cur = ids_ref[b, s]
        row_copy(s, tok_cur, slot).wait()

        @pl.when(nxt < S)
        def _():
            row_copy(nxt, tok_next, slot).start()
        return carry

    lax.fori_loop(0, S, gather_step, 0)

    # ---- apply fixes in order (later fixes override earlier ones) ----
    for f in range(MAXF):
        offset = off_ref[b, f]

        @pl.when(offset >= 0)                      # sentinel slots cost nothing
        def _apply(f=f, offset=offset):
            pltpu.make_async_copy(vecs_hbm.at[b, f], vec_buf.at[f],
                                  vsem.at[f]).wait()
            start = offset + 1
            emb_len = jnp.minimum(jnp.minimum(S - start, len_ref[b, f]), MAXL)
            emb_len = jnp.maximum(emb_len, 0)

            @pl.loop(0, emb_len)                   # predicated row copies
            def _(l):
                out_ref[pl.ds(start + l, 1), :] = vec_buf[f, pl.ds(l, 1), :]


def embeddings_with_fixes(input_ids, weight, fix_offsets, fix_lengths, fix_vecs):
    """input_ids [B,S] int32, weight [V,D] f32 (D should be a multiple of 128),
    fix_offsets/fix_lengths [B,MAXF] int32, fix_vecs [B,MAXF,MAXL,D] f32."""
    B, S = input_ids.shape
    V, D = weight.shape
    MAXF, MAXL = fix_vecs.shape[1], fix_vecs.shape[2]

    grid_spec = pltpu.PrefetchScalarGridSpec(
        num_scalar_prefetch=3,                     # input_ids, offsets, lengths
        grid=(B,),
        in_specs=[
            # embedding table: stays in HBM, gathered with manual row DMAs
            pl.BlockSpec(memory_space=pl.ANY),
            # fix vectors: stay in HBM, DMA'd on demand for active fixes only
            pl.BlockSpec(memory_space=pl.ANY),
        ],
        out_specs=pl.BlockSpec((None, S, D), lambda b, ids, off, ln: (b, 0, 0)),
        scratch_shapes=[
            pltpu.VMEM((MAXF, MAXL, D), weight.dtype),
            pltpu.SemaphoreType.DMA((_NBUF,)),
            pltpu.SemaphoreType.DMA((MAXF,)),
        ],
    )

    return pl.pallas_call(
        _emb_fix_kernel,
        out_shape=jax.ShapeDtypeStruct((B, S, D), weight.dtype),
        grid_spec=grid_spec,
        compiler_params=pltpu.CompilerParams(
            dimension_semantics=("parallel",)),    # batch rows -> both TCs
    )(input_ids.astype(jnp.int32), fix_offsets.astype(jnp.int32),
      fix_lengths.astype(jnp.int32), weight, fix_vecs)


def _reference(input_ids, weight, fix_offsets, fix_lengths, fix_vecs):
    """NumPy mirror of the PyTorch forward."""
    B, S = input_ids.shape
    out = weight[input_ids].copy()                 # gather
    for b in range(B):
        tensor = out[b].copy()
        for f in range(fix_offsets.shape[1]):
            offset = int(fix_offsets[b, f])
            if offset < 0:
                continue
            emb = fix_vecs[b, f, : int(fix_lengths[b, f])]
            emb_len = min(tensor.shape[0] - offset - 1, emb.shape[0])
            if emb_len > 0:
                tensor = np.concatenate(
                    [tensor[: offset + 1], emb[:emb_len],
                     tensor[offset + 1 + emb_len:]], axis=0)
        out[b] = tensor
    return out


if __name__ == "__main__":
    # Small shapes: D multiple of 128, S multiple of 8 (lane/sublane dense).
    B, S, D, V = 2, 8, 128, 64
    MAXF, MAXL = 2, 8

    key = jax.random.PRNGKey(0)
    k_w, k_ids, k_vecs = jax.random.split(key, 3)

    weight = jax.random.normal(k_w, (V, D), dtype=jnp.float32)
    input_ids = jax.random.randint(k_ids, (B, S), 0, V, dtype=jnp.int32)
    fix_vecs = jax.random.normal(k_vecs, (B, MAXF, MAXL, D), dtype=jnp.float32)

    # batch 0: fix at offset 2 (len 4), fix at offset 5 (len 8 -> clipped to 2,
    #          overriding a row written by the first fix)
    # batch 1: fix at offset 0 (len 2), second slot unused (sentinel -1)
    fix_offsets = jnp.array([[2, 5], [0, -1]], dtype=jnp.int32)
    fix_lengths = jnp.array([[4, 8], [2, 0]], dtype=jnp.int32)

    out = embeddings_with_fixes(input_ids, weight, fix_offsets, fix_lengths,
                                fix_vecs)
    out = jax.block_until_ready(out)

    ref = _reference(np.asarray(input_ids), np.asarray(weight),
                     np.asarray(fix_offsets), np.asarray(fix_lengths),
                     np.asarray(fix_vecs))
    assert out.shape == (B, S, D)
    np.testing.assert_allclose(np.asarray(out), ref, rtol=1e-5, atol=1e-5)

    # TODO(synk): the PyTorch "batch_fixes is None -> early return" branch is
    # host-side control flow; here it is represented by the -1 offset sentinel.
    print("KERNEL_OK")
</pallas_src>

<mosaic_0001>
module attributes {stable_mosaic.version = 11 : i64} {
  func.func @_emb_fix_kernel(%arg0: i32, %arg1: memref<2x8xi32, #tpu.memory_space<smem>>, %arg2: memref<2x2xi32, #tpu.memory_space<smem>>, %arg3: memref<2x2xi32, #tpu.memory_space<smem>>, %arg4: memref<64x128xf32, #tpu.memory_space<any>>, %arg5: memref<2x2x8x128xf32, #tpu.memory_space<any>>, %arg6: memref<1x8x128xf32, #tpu.memory_space<vmem>>, %arg7: memref<2x8x128xf32, #tpu.memory_space<vmem>>, %arg8: memref<8x!tpu.dma_semaphore, #tpu.memory_space<semaphore_mem>>, %arg9: memref<2x!tpu.dma_semaphore, #tpu.memory_space<semaphore_mem>>) attributes {dimension_semantics = [#tpu.dimension_semantics<parallel>], iteration_bounds = array<i64: 2>, scalar_prefetch = 3 : i64, scratch_operands = 3 : i64, tpu.core_type = #tpu.core_type<tc>, window_params = [{}, {}, {transform_indices = @transform_2, window_bounds = array<i64: 1, 8, 128>}]} {
    %0 = arith.index_cast %arg0 : i32 to index
    %c0 = arith.constant 0 : index
    %1 = memref.load %arg1[%0, %c0] : memref<2x8xi32, #tpu.memory_space<smem>>
    %c0_i32 = arith.constant 0 : i32
    %c0_i32_0 = arith.constant 0 : i32
    %2 = tpu.memref_slice %arg4[%1, %c0_i32_0] : memref<64x128xf32, #tpu.memory_space<any>> -> memref<1x128xf32, #tpu.memory_space<any>>
    %c0_i32_1 = arith.constant 0 : i32
    %c0_i32_2 = arith.constant 0 : i32
    %c0_i32_3 = arith.constant 0 : i32
    %3 = tpu.memref_slice %arg6[%c0_i32_1, %c0_i32_2, %c0_i32_3] : memref<1x8x128xf32, #tpu.memory_space<vmem>> -> memref<1x1x128xf32, #tpu.memory_space<vmem>>
    %4 = tpu.memref_squeeze %3 : memref<1x1x128xf32, #tpu.memory_space<vmem>> -> memref<1x128xf32, #tpu.memory_space<vmem>>
    %5 = tpu.memref_slice %arg8[%c0_i32] : memref<8x!tpu.dma_semaphore, #tpu.memory_space<semaphore_mem>> -> memref<1x!tpu.dma_semaphore, #tpu.memory_space<semaphore_mem>>
    %6 = tpu.memref_squeeze %5 : memref<1x!tpu.dma_semaphore, #tpu.memory_space<semaphore_mem>> -> memref<!tpu.dma_semaphore, #tpu.memory_space<semaphore_mem>>
    tpu.enqueue_dma source(%2 : memref<1x128xf32, #tpu.memory_space<any>>) target(%4 : memref<1x128xf32, #tpu.memory_space<vmem>>) target_semaphore(%6 : memref<!tpu.dma_semaphore, #tpu.memory_space<semaphore_mem>>)
    %7 = arith.index_cast %arg0 : i32 to index
    %c1 = arith.constant 1 : index
    %8 = memref.load %arg1[%7, %c1] : memref<2x8xi32, #tpu.memory_space<smem>>
    %c1_i32 = arith.constant 1 : i32
    %c0_i32_4 = arith.constant 0 : i32
    %9 = tpu.memref_slice %arg4[%8, %c0_i32_4] : memref<64x128xf32, #tpu.memory_space<any>> -> memref<1x128xf32, #tpu.memory_space<any>>
    %c0_i32_5 = arith.constant 0 : i32
    %c1_i32_6 = arith.constant 1 : i32
    %c0_i32_7 = arith.constant 0 : i32
    %10 = tpu.memref_slice %arg6[%c0_i32_5, %c1_i32_6, %c0_i32_7] : memref<1x8x128xf32, #tpu.memory_space<vmem>> -> memref<1x1x128xf32, #tpu.memory_space<vmem>>
    %11 = tpu.memref_squeeze %10 : memref<1x1x128xf32, #tpu.memory_space<vmem>> -> memref<1x128xf32, #tpu.memory_space<vmem>>
    %12 = tpu.memref_slice %arg8[%c1_i32] : memref<8x!tpu.dma_semaphore, #tpu.memory_space<semaphore_mem>> -> memref<1x!tpu.dma_semaphore, #tpu.memory_space<semaphore_mem>>
    %13 = tpu.memref_squeeze %12 : memref<1x!tpu.dma_semaphore, #tpu.memory_space<semaphore_mem>> -> memref<!tpu.dma_semaphore, #tpu.memory_space<semaphore_mem>>
    tpu.enqueue_dma source(%9 : memref<1x128xf32, #tpu.memory_space<any>>) target(%11 : memref<1x128xf32, #tpu.memory_space<vmem>>) target_semaphore(%13 : memref<!tpu.dma_semaphore, #tpu.memory_space<semaphore_mem>>)
    %14 = arith.index_cast %arg0 : i32 to index
    %c2 = arith.constant 2 : index
    %15 = memref.load %arg1[%14, %c2] : memref<2x8xi32, #tpu.memory_space<smem>>
    %c2_i32 = arith.constant 2 : i32
    %c0_i32_8 = arith.constant 0 : i32
    %16 = tpu.memref_slice %arg4[%15, %c0_i32_8] : memref<64x128xf32, #tpu.memory_space<any>> -> memref<1x128xf32, #tpu.memory_space<any>>
    %c0_i32_9 = arith.constant 0 : i32
    %c2_i32_10 = arith.constant 2 : i32
    %c0_i32_11 = arith.constant 0 : i32
    %17 = tpu.memref_slice %arg6[%c0_i32_9, %c2_i32_10, %c0_i32_11] : memref<1x8x128xf32, #tpu.memory_space<vmem>> -> memref<1x1x128xf32, #tpu.memory_space<vmem>>
    %18 = tpu.memref_squeeze %17 : memref<1x1x128xf32, #tpu.memory_space<vmem>> -> memref<1x128xf32, #tpu.memory_space<vmem>>
    %19 = tpu.memref_slice %arg8[%c2_i32] : memref<8x!tpu.dma_semaphore, #tpu.memory_space<semaphore_mem>> -> memref<1x!tpu.dma_semaphore, #tpu.memory_space<semaphore_mem>>
    %20 = tpu.memref_squeeze %19 : memref<1x!tpu.dma_semaphore, #tpu.memory_space<semaphore_mem>> -> memref<!tpu.dma_semaphore, #tpu.memory_space<semaphore_mem>>
    tpu.enqueue_dma source(%16 : memref<1x128xf32, #tpu.memory_space<any>>) target(%18 : memref<1x128xf32, #tpu.memory_space<vmem>>) target_semaphore(%20 : memref<!tpu.dma_semaphore, #tpu.memory_space<semaphore_mem>>)
    %21 = arith.index_cast %arg0 : i32 to index
    %c3 = arith.constant 3 : index
    %22 = memref.load %arg1[%21, %c3] : memref<2x8xi32, #tpu.memory_space<smem>>
    %c3_i32 = arith.constant 3 : i32
    %c0_i32_12 = arith.constant 0 : i32
    %23 = tpu.memref_slice %arg4[%22, %c0_i32_12] : memref<64x128xf32, #tpu.memory_space<any>> -> memref<1x128xf32, #tpu.memory_space<any>>
    %c0_i32_13 = arith.constant 0 : i32
    %c3_i32_14 = arith.constant 3 : i32
    %c0_i32_15 = arith.constant 0 : i32
    %24 = tpu.memref_slice %arg6[%c0_i32_13, %c3_i32_14, %c0_i32_15] : memref<1x8x128xf32, #tpu.memory_space<vmem>> -> memref<1x1x128xf32, #tpu.memory_space<vmem>>
    %25 = tpu.memref_squeeze %24 : memref<1x1x128xf32, #tpu.memory_space<vmem>> -> memref<1x128xf32, #tpu.memory_space<vmem>>
    %26 = tpu.memref_slice %arg8[%c3_i32] : memref<8x!tpu.dma_semaphore, #tpu.memory_space<semaphore_mem>> -> memref<1x!tpu.dma_semaphore, #tpu.memory_space<semaphore_mem>>
    %27 = tpu.memref_squeeze %26 : memref<1x!tpu.dma_semaphore, #tpu.memory_space<semaphore_mem>> -> memref<!tpu.dma_semaphore, #tpu.memory_space<semaphore_mem>>
    tpu.enqueue_dma source(%23 : memref<1x128xf32, #tpu.memory_space<any>>) target(%25 : memref<1x128xf32, #tpu.memory_space<vmem>>) target_semaphore(%27 : memref<!tpu.dma_semaphore, #tpu.memory_space<semaphore_mem>>)
    %28 = arith.index_cast %arg0 : i32 to index
    %c4 = arith.constant 4 : index
    %29 = memref.load %arg1[%28, %c4] : memref<2x8xi32, #tpu.memory_space<smem>>
    %c4_i32 = arith.constant 4 : i32
    %c0_i32_16 = arith.constant 0 : i32
    %30 = tpu.memref_slice %arg4[%29, %c0_i32_16] : memref<64x128xf32, #tpu.memory_space<any>> -> memref<1x128xf32, #tpu.memory_space<any>>
    %c0_i32_17 = arith.constant 0 : i32
    %c4_i32_18 = arith.constant 4 : i32
    %c0_i32_19 = arith.constant 0 : i32
    %31 = tpu.memref_slice %arg6[%c0_i32_17, %c4_i32_18, %c0_i32_19] : memref<1x8x128xf32, #tpu.memory_space<vmem>> -> memref<1x1x128xf32, #tpu.memory_space<vmem>>
    %32 = tpu.memref_squeeze %31 : memref<1x1x128xf32, #tpu.memory_space<vmem>> -> memref<1x128xf32, #tpu.memory_space<vmem>>
    %33 = tpu.memref_slice %arg8[%c4_i32] : memref<8x!tpu.dma_semaphore, #tpu.memory_space<semaphore_mem>> -> memref<1x!tpu.dma_semaphore, #tpu.memory_space<semaphore_mem>>
    %34 = tpu.memref_squeeze %33 : memref<1x!tpu.dma_semaphore, #tpu.memory_space<semaphore_mem>> -> memref<!tpu.dma_semaphore, #tpu.memory_space<semaphore_mem>>
    tpu.enqueue_dma source(%30 : memref<1x128xf32, #tpu.memory_space<any>>) target(%32 : memref<1x128xf32, #tpu.memory_space<vmem>>) target_semaphore(%34 : memref<!tpu.dma_semaphore, #tpu.memory_space<semaphore_mem>>)
    %35 = arith.index_cast %arg0 : i32 to index
    %c5 = arith.constant 5 : index
    %36 = memref.load %arg1[%35, %c5] : memref<2x8xi32, #tpu.memory_space<smem>>
    %c5_i32 = arith.constant 5 : i32
    %c0_i32_20 = arith.constant 0 : i32
    %37 = tpu.memref_slice %arg4[%36, %c0_i32_20] : memref<64x128xf32, #tpu.memory_space<any>> -> memref<1x128xf32, #tpu.memory_space<any>>
    %c0_i32_21 = arith.constant 0 : i32
    %c5_i32_22 = arith.constant 5 : i32
    %c0_i32_23 = arith.constant 0 : i32
    %38 = tpu.memref_slice %arg6[%c0_i32_21, %c5_i32_22, %c0_i32_23] : memref<1x8x128xf32, #tpu.memory_space<vmem>> -> memref<1x1x128xf32, #tpu.memory_space<vmem>>
    %39 = tpu.memref_squeeze %38 : memref<1x1x128xf32, #tpu.memory_space<vmem>> -> memref<1x128xf32, #tpu.memory_space<vmem>>
    %40 = tpu.memref_slice %arg8[%c5_i32] : memref<8x!tpu.dma_semaphore, #tpu.memory_space<semaphore_mem>> -> memref<1x!tpu.dma_semaphore, #tpu.memory_space<semaphore_mem>>
    %41 = tpu.memref_squeeze %40 : memref<1x!tpu.dma_semaphore, #tpu.memory_space<semaphore_mem>> -> memref<!tpu.dma_semaphore, #tpu.memory_space<semaphore_mem>>
    tpu.enqueue_dma source(%37 : memref<1x128xf32, #tpu.memory_space<any>>) target(%39 : memref<1x128xf32, #tpu.memory_space<vmem>>) target_semaphore(%41 : memref<!tpu.dma_semaphore, #tpu.memory_space<semaphore_mem>>)
    %42 = arith.index_cast %arg0 : i32 to index
    %c6 = arith.constant 6 : index
    %43 = memref.load %arg1[%42, %c6] : memref<2x8xi32, #tpu.memory_space<smem>>
    %c6_i32 = arith.constant 6 : i32
    %c0_i32_24 = arith.constant 0 : i32
    %44 = tpu.memref_slice %arg4[%43, %c0_i32_24] : memref<64x128xf32, #tpu.memory_space<any>> -> memref<1x128xf32, #tpu.memory_space<any>>
    %c0_i32_25 = arith.constant 0 : i32
    %c6_i32_26 = arith.constant 6 : i32
    %c0_i32_27 = arith.constant 0 : i32
    %45 = tpu.memref_slice %arg6[%c0_i32_25, %c6_i32_26, %c0_i32_27] : memref<1x8x128xf32, #tpu.memory_space<vmem>> -> memref<1x1x128xf32, #tpu.memory_space<vmem>>
    %46 = tpu.memref_squeeze %45 : memref<1x1x128xf32, #tpu.memory_space<vmem>> -> memref<1x128xf32, #tpu.memory_space<vmem>>
    %47 = tpu.memref_slice %arg8[%c6_i32] : memref<8x!tpu.dma_semaphore, #tpu.memory_space<semaphore_mem>> -> memref<1x!tpu.dma_semaphore, #tpu.memory_space<semaphore_mem>>
    %48 = tpu.memref_squeeze %47 : memref<1x!tpu.dma_semaphore, #tpu.memory_space<semaphore_mem>> -> memref<!tpu.dma_semaphore, #tpu.memory_space<semaphore_mem>>
    tpu.enqueue_dma source(%44 : memref<1x128xf32, #tpu.memory_space<any>>) target(%46 : memref<1x128xf32, #tpu.memory_space<vmem>>) target_semaphore(%48 : memref<!tpu.dma_semaphore, #tpu.memory_space<semaphore_mem>>)
    %49 = arith.index_cast %arg0 : i32 to index
    %c7 = arith.constant 7 : index
    %50 = memref.load %arg1[%49, %c7] : memref<2x8xi32, #tpu.memory_space<smem>>
    %c7_i32 = arith.constant 7 : i32
    %c0_i32_28 = arith.constant 0 : i32
    %51 = tpu.memref_slice %arg4[%50, %c0_i32_28] : memref<64x128xf32, #tpu.memory_space<any>> -> memref<1x128xf32, #tpu.memory_space<any>>
    %c0_i32_29 = arith.constant 0 : i32
    %c7_i32_30 = arith.constant 7 : i32
    %c0_i32_31 = arith.constant 0 : i32
    %52 = tpu.memref_slice %arg6[%c0_i32_29, %c7_i32_30, %c0_i32_31] : memref<1x8x128xf32, #tpu.memory_space<vmem>> -> memref<1x1x128xf32, #tpu.memory_space<vmem>>
    %53 = tpu.memref_squeeze %52 : memref<1x1x128xf32, #tpu.memory_space<vmem>> -> memref<1x128xf32, #tpu.memory_space<vmem>>
    %54 = tpu.memref_slice %arg8[%c7_i32] : memref<8x!tpu.dma_semaphore, #tpu.memory_space<semaphore_mem>> -> memref<1x!tpu.dma_semaphore, #tpu.memory_space<semaphore_mem>>
    %55 = tpu.memref_squeeze %54 : memref<1x!tpu.dma_semaphore, #tpu.memory_space<semaphore_mem>> -> memref<!tpu.dma_semaphore, #tpu.memory_space<semaphore_mem>>
    tpu.enqueue_dma source(%51 : memref<1x128xf32, #tpu.memory_space<any>>) target(%53 : memref<1x128xf32, #tpu.memory_space<vmem>>) target_semaphore(%55 : memref<!tpu.dma_semaphore, #tpu.memory_space<semaphore_mem>>)
    %56 = arith.index_cast %arg0 : i32 to index
    %c0_32 = arith.constant 0 : index
    %57 = memref.load %arg2[%56, %c0_32] : memref<2x2xi32, #tpu.memory_space<smem>>
    %c0_i32_33 = arith.constant 0 : i32
    %58 = arith.cmpi sge, %57, %c0_i32_33 : i32
    %59 = arith.extui %58 : i1 to i32
    %c0_i32_34 = arith.constant 0 : i32
    %60 = arith.cmpi ne, %59, %c0_i32_34 : i32
    scf.if %60 {
      %c0_i32_47 = arith.constant 0 : i32
      %c0_i32_48 = arith.constant 0 : i32
      %c0_i32_49 = arith.constant 0 : i32
      %c0_i32_50 = arith.constant 0 : i32
      %c0_i32_51 = arith.constant 0 : i32
      %77 = tpu.memref_slice %arg5[%arg0, %c0_i32_47, %c0_i32_50, %c0_i32_51] : memref<2x2x8x128xf32, #tpu.memory_space<any>> -> memref<1x1x8x128xf32, #tpu.memory_space<any>>
      %78 = tpu.memref_squeeze %77 : memref<1x1x8x128xf32, #tpu.memory_space<any>> -> memref<8x128xf32, #tpu.memory_space<any>>
      %c0_i32_52 = arith.constant 0 : i32
      %c0_i32_53 = arith.constant 0 : i32
      %79 = tpu.memref_slice %arg7[%c0_i32_48, %c0_i32_52, %c0_i32_53] : memref<2x8x128xf32, #tpu.memory_space<vmem>> -> memref<1x8x128xf32, #tpu.memory_space<vmem>>
      %80 = tpu.memref_squeeze %79 : memref<1x8x128xf32, #tpu.memory_space<vmem>> -> memref<8x128xf32, #tpu.memory_space<vmem>>
      %81 = tpu.memref_slice %arg9[%c0_i32_49] : memref<2x!tpu.dma_semaphore, #tpu.memory_space<semaphore_mem>> -> memref<1x!tpu.dma_semaphore, #tpu.memory_space<semaphore_mem>>
      %82 = tpu.memref_squeeze %81 : memref<1x!tpu.dma_semaphore, #tpu.memory_space<semaphore_mem>> -> memref<!tpu.dma_semaphore, #tpu.memory_space<semaphore_mem>>
      tpu.enqueue_dma source(%78 : memref<8x128xf32, #tpu.memory_space<any>>) target(%80 : memref<8x128xf32, #tpu.memory_space<vmem>>) target_semaphore(%82 : memref<!tpu.dma_semaphore, #tpu.memory_space<semaphore_mem>>)
    } else {
    }
    %61 = arith.index_cast %arg0 : i32 to index
    %c1_35 = arith.constant 1 : index
    %62 = memref.load %arg2[%61, %c1_35] : memref<2x2xi32, #tpu.memory_space<smem>>
    %c0_i32_36 = arith.constant 0 : i32
    %63 = arith.cmpi sge, %62, %c0_i32_36 : i32
    %64 = arith.extui %63 : i1 to i32
    %c0_i32_37 = arith.constant 0 : i32
    %65 = arith.cmpi ne, %64, %c0_i32_37 : i32
    scf.if %65 {
      %c1_i32_47 = arith.constant 1 : i32
      %c1_i32_48 = arith.constant 1 : i32
      %c1_i32_49 = arith.constant 1 : i32
      %c0_i32_50 = arith.constant 0 : i32
      %c0_i32_51 = arith.constant 0 : i32
      %77 = tpu.memref_slice %arg5[%arg0, %c1_i32_47, %c0_i32_50, %c0_i32_51] : memref<2x2x8x128xf32, #tpu.memory_space<any>> -> memref<1x1x8x128xf32, #tpu.memory_space<any>>
      %78 = tpu.memref_squeeze %77 : memref<1x1x8x128xf32, #tpu.memory_space<any>> -> memref<8x128xf32, #tpu.memory_space<any>>
      %c0_i32_52 = arith.constant 0 : i32
      %c0_i32_53 = arith.constant 0 : i32
      %79 = tpu.memref_slice %arg7[%c1_i32_48, %c0_i32_52, %c0_i32_53] : memref<2x8x128xf32, #tpu.memory_space<vmem>> -> memref<1x8x128xf32, #tpu.memory_space<vmem>>
      %80 = tpu.memref_squeeze %79 : memref<1x8x128xf32, #tpu.memory_space<vmem>> -> memref<8x128xf32, #tpu.memory_space<vmem>>
      %81 = tpu.memref_slice %arg9[%c1_i32_49] : memref<2x!tpu.dma_semaphore, #tpu.memory_space<semaphore_mem>> -> memref<1x!tpu.dma_semaphore, #tpu.memory_space<semaphore_mem>>
      %82 = tpu.memref_squeeze %81 : memref<1x!tpu.dma_semaphore, #tpu.memory_space<semaphore_mem>> -> memref<!tpu.dma_semaphore, #tpu.memory_space<semaphore_mem>>
      tpu.enqueue_dma source(%78 : memref<8x128xf32, #tpu.memory_space<any>>) target(%80 : memref<8x128xf32, #tpu.memory_space<vmem>>) target_semaphore(%82 : memref<!tpu.dma_semaphore, #tpu.memory_space<semaphore_mem>>)
    } else {
    }
    %c0_i32_38 = arith.constant 0 : i32
    %c8_i32 = arith.constant 8 : i32
    %66 = arith.addi %c0_i32_38, %c8_i32 : i32
    %c1_i32_39 = arith.constant 1 : i32
    scf.for %arg10 = %c0_i32_38 to %66 step %c1_i32_39  : i32 {
      %c7_i32_47 = arith.constant 7 : i32
      %77 = arith.andi %arg10, %c7_i32_47 : i32
      %c8_i32_48 = arith.constant 8 : i32
      %78 = arith.addi %arg10, %c8_i32_48 : i32
      %c7_i32_49 = arith.constant 7 : i32
      %79 = arith.minsi %78, %c7_i32_49 : i32
      %80 = arith.index_cast %arg0 : i32 to index
      %81 = arith.index_cast %79 : i32 to index
      %82 = memref.load %arg1[%80, %81] : memref<2x8xi32, #tpu.memory_space<smem>>
      %83 = arith.index_cast %arg0 : i32 to index
      %84 = arith.index_cast %arg10 : i32 to index
      %85 = memref.load %arg1[%83, %84] : memref<2x8xi32, #tpu.memory_space<smem>>
      %c0_i32_50 = arith.constant 0 : i32
      %86 = tpu.memref_slice %arg4[%85, %c0_i32_50] : memref<64x128xf32, #tpu.memory_space<any>> -> memref<1x128xf32, #tpu.memory_space<any>>
      %c0_i32_51 = arith.constant 0 : i32
      %c0_i32_52 = arith.constant 0 : i32
      %87 = tpu.memref_slice %arg6[%c0_i32_51, %arg10, %c0_i32_52] : memref<1x8x128xf32, #tpu.memory_space<vmem>> -> memref<1x1x128xf32, #tpu.memory_space<vmem>>
      %88 = tpu.memref_squeeze %87 : memref<1x1x128xf32, #tpu.memory_space<vmem>> -> memref<1x128xf32, #tpu.memory_space<vmem>>
      %89 = tpu.memref_slice %arg8[%77] : memref<8x!tpu.dma_semaphore, #tpu.memory_space<semaphore_mem>> -> memref<1x!tpu.dma_semaphore, #tpu.memory_space<semaphore_mem>>
      %90 = tpu.memref_squeeze %89 : memref<1x!tpu.dma_semaphore, #tpu.memory_space<semaphore_mem>> -> memref<!tpu.dma_semaphore, #tpu.memory_space<semaphore_mem>>
      tpu.wait_dma2 semaphore(%90 : memref<!tpu.dma_semaphore, #tpu.memory_space<semaphore_mem>>) src(%86 : memref<1x128xf32, #tpu.memory_space<any>>) dst(%88 : memref<1x128xf32, #tpu.memory_space<vmem>>)
      %c8_i32_53 = arith.constant 8 : i32
      %91 = arith.cmpi slt, %78, %c8_i32_53 : i32
      %92 = arith.extui %91 : i1 to i32
      %c0_i32_54 = arith.constant 0 : i32
      %93 = arith.cmpi ne, %92, %c0_i32_54 : i32
      scf.if %93 {
        %c0_i32_55 = arith.constant 0 : i32
        %94 = tpu.memref_slice %arg4[%82, %c0_i32_55] : memref<64x128xf32, #tpu.memory_space<any>> -> memref<1x128xf32, #tpu.memory_space<any>>
        %c0_i32_56 = arith.constant 0 : i32
        %c0_i32_57 = arith.constant 0 : i32
        %95 = tpu.memref_slice %arg6[%c0_i32_56, %78, %c0_i32_57] : memref<1x8x128xf32, #tpu.memory_space<vmem>> -> memref<1x1x128xf32, #tpu.memory_space<vmem>>
        %96 = tpu.memref_squeeze %95 : memref<1x1x128xf32, #tpu.memory_space<vmem>> -> memref<1x128xf32, #tpu.memory_space<vmem>>
        %97 = tpu.memref_slice %arg8[%77] : memref<8x!tpu.dma_semaphore, #tpu.memory_space<semaphore_mem>> -> memref<1x!tpu.dma_semaphore, #tpu.memory_space<semaphore_mem>>
        %98 = tpu.memref_squeeze %97 : memref<1x!tpu.dma_semaphore, #tpu.memory_space<semaphore_mem>> -> memref<!tpu.dma_semaphore, #tpu.memory_space<semaphore_mem>>
        tpu.enqueue_dma source(%94 : memref<1x128xf32, #tpu.memory_space<any>>) target(%96 : memref<1x128xf32, #tpu.memory_space<vmem>>) target_semaphore(%98 : memref<!tpu.dma_semaphore, #tpu.memory_space<semaphore_mem>>)
      } else {
      }
    }
    %c8_i32_40 = arith.constant 8 : i32
    %67 = arith.index_cast %arg0 : i32 to index
    %c0_41 = arith.constant 0 : index
    %68 = memref.load %arg2[%67, %c0_41] : memref<2x2xi32, #tpu.memory_space<smem>>
    %c0_i32_42 = arith.constant 0 : i32
    %69 = arith.cmpi sge, %68, %c0_i32_42 : i32
    %70 = arith.extui %69 : i1 to i32
    %c0_i32_43 = arith.constant 0 : i32
    %71 = arith.cmpi ne, %70, %c0_i32_43 : i32
    scf.if %71 {
      %c0_i32_47 = arith.constant 0 : i32
      %c0_i32_48 = arith.constant 0 : i32
      %c0_i32_49 = arith.constant 0 : i32
      %c0_i32_50 = arith.constant 0 : i32
      %c0_i32_51 = arith.constant 0 : i32
      %77 = tpu.memref_slice %arg5[%arg0, %c0_i32_47, %c0_i32_50, %c0_i32_51] : memref<2x2x8x128xf32, #tpu.memory_space<any>> -> memref<1x1x8x128xf32, #tpu.memory_space<any>>
      %78 = tpu.memref_squeeze %77 : memref<1x1x8x128xf32, #tpu.memory_space<any>> -> memref<8x128xf32, #tpu.memory_space<any>>
      %c0_i32_52 = arith.constant 0 : i32
      %c0_i32_53 = arith.constant 0 : i32
      %79 = tpu.memref_slice %arg7[%c0_i32_48, %c0_i32_52, %c0_i32_53] : memref<2x8x128xf32, #tpu.memory_space<vmem>> -> memref<1x8x128xf32, #tpu.memory_space<vmem>>
      %80 = tpu.memref_squeeze %79 : memref<1x8x128xf32, #tpu.memory_space<vmem>> -> memref<8x128xf32, #tpu.memory_space<vmem>>
      %81 = tpu.memref_slice %arg9[%c0_i32_49] : memref<2x!tpu.dma_semaphore, #tpu.memory_space<semaphore_mem>> -> memref<1x!tpu.dma_semaphore, #tpu.memory_space<semaphore_mem>>
      %82 = tpu.memref_squeeze %81 : memref<1x!tpu.dma_semaphore, #tpu.memory_space<semaphore_mem>> -> memref<!tpu.dma_semaphore, #tpu.memory_space<semaphore_mem>>
      tpu.wait_dma2 semaphore(%82 : memref<!tpu.dma_semaphore, #tpu.memory_space<semaphore_mem>>) src(%78 : memref<8x128xf32, #tpu.memory_space<any>>) dst(%80 : memref<8x128xf32, #tpu.memory_space<vmem>>)
      %c1_i32_54 = arith.constant 1 : i32
      %83 = arith.addi %68, %c1_i32_54 : i32
      %c8_i32_55 = arith.constant 8 : i32
      %84 = arith.subi %c8_i32_55, %83 : i32
      %85 = arith.index_cast %arg0 : i32 to index
      %c0_56 = arith.constant 0 : index
      %86 = memref.load %arg3[%85, %c0_56] : memref<2x2xi32, #tpu.memory_space<smem>>
      %87 = arith.minsi %84, %86 : i32
      %c8_i32_57 = arith.constant 8 : i32
      %88 = arith.minsi %87, %c8_i32_57 : i32
      %c0_i32_58 = arith.constant 0 : i32
      %89 = arith.maxsi %88, %c0_i32_58 : i32
      %c0_i32_59 = arith.constant 0 : i32
      %90 = arith.subi %89, %c0_i32_59 : i32
      %c1_i32_60 = arith.constant 1 : i32
      %c1_i32_61 = arith.constant 1 : i32
      %91 = arith.subi %c1_i32_60, %c1_i32_61 : i32
      %92 = arith.addi %90, %91 : i32
      %c1_i32_62 = arith.constant 1 : i32
      %93 = arith.divsi %92, %c1_i32_62 : i32
      %c1_i32_63 = arith.constant 1 : i32
      %c0_i32_64 = arith.constant 0 : i32
      %c0_i32_65 = arith.constant 0 : i32
      %94 = arith.subi %93, %c0_i32_65 : i32
      %95 = arith.addi %c0_i32_65, %94 : i32
      %c1_i32_66 = arith.constant 1 : i32
      scf.for %arg10 = %c0_i32_65 to %95 step %c1_i32_66  : i32 {
        %96 = arith.muli %arg10, %c1_i32_63 : i32
        %97 = arith.addi %c0_i32_64, %96 : i32
        %c0_67 = arith.constant 0 : index
        %98 = arith.index_cast %97 : i32 to index
        %c0_68 = arith.constant 0 : index
        %99 = vector.load %arg7[%c0_67, %98, %c0_68] : memref<2x8x128xf32, #tpu.memory_space<vmem>>, vector<1x1x128xf32>
        %100 = vector.shape_cast %99 : vector<1x1x128xf32> to vector<1x128xf32>
        %101 = arith.addi %83, %97 : i32
        %c0_69 = arith.constant 0 : index
        %102 = arith.index_cast %101 : i32 to index
        %c0_70 = arith.constant 0 : index
        %103 = vector.load %arg6[%c0_69, %102, %c0_70] : memref<1x8x128xf32, #tpu.memory_space<vmem>>, vector<1x1x128xf32>
        %104 = vector.shape_cast %103 : vector<1x1x128xf32> to vector<1x128xf32>
        %105 = vector.shape_cast %100 : vector<1x128xf32> to vector<1x1x128xf32>
        tpu.vector_store %arg6[%c0_69, %102, %c0_70], %105 {strides = array<i32>} : memref<1x8x128xf32, #tpu.memory_space<vmem>>, vector<1x1x128xf32>,
      }
    } else {
    }
    %72 = arith.index_cast %arg0 : i32 to index
    %c1_44 = arith.constant 1 : index
    %73 = memref.load %arg2[%72, %c1_44] : memref<2x2xi32, #tpu.memory_space<smem>>
    %c0_i32_45 = arith.constant 0 : i32
    %74 = arith.cmpi sge, %73, %c0_i32_45 : i32
    %75 = arith.extui %74 : i1 to i32
    %c0_i32_46 = arith.constant 0 : i32
    %76 = arith.cmpi ne, %75, %c0_i32_46 : i32
    scf.if %76 {
      %c1_i32_47 = arith.constant 1 : i32
      %c1_i32_48 = arith.constant 1 : i32
      %c1_i32_49 = arith.constant 1 : i32
      %c0_i32_50 = arith.constant 0 : i32
      %c0_i32_51 = arith.constant 0 : i32
      %77 = tpu.memref_slice %arg5[%arg0, %c1_i32_47, %c0_i32_50, %c0_i32_51] : memref<2x2x8x128xf32, #tpu.memory_space<any>> -> memref<1x1x8x128xf32, #tpu.memory_space<any>>
      %78 = tpu.memref_squeeze %77 : memref<1x1x8x128xf32, #tpu.memory_space<any>> -> memref<8x128xf32, #tpu.memory_space<any>>
      %c0_i32_52 = arith.constant 0 : i32
      %c0_i32_53 = arith.constant 0 : i32
      %79 = tpu.memref_slice %arg7[%c1_i32_48, %c0_i32_52, %c0_i32_53] : memref<2x8x128xf32, #tpu.memory_space<vmem>> -> memref<1x8x128xf32, #tpu.memory_space<vmem>>
      %80 = tpu.memref_squeeze %79 : memref<1x8x128xf32, #tpu.memory_space<vmem>> -> memref<8x128xf32, #tpu.memory_space<vmem>>
      %81 = tpu.memref_slice %arg9[%c1_i32_49] : memref<2x!tpu.dma_semaphore, #tpu.memory_space<semaphore_mem>> -> memref<1x!tpu.dma_semaphore, #tpu.memory_space<semaphore_mem>>
      %82 = tpu.memref_squeeze %81 : memref<1x!tpu.dma_semaphore, #tpu.memory_space<semaphore_mem>> -> memref<!tpu.dma_semaphore, #tpu.memory_space<semaphore_mem>>
      tpu.wait_dma2 semaphore(%82 : memref<!tpu.dma_semaphore, #tpu.memory_space<semaphore_mem>>) src(%78 : memref<8x128xf32, #tpu.memory_space<any>>) dst(%80 : memref<8x128xf32, #tpu.memory_space<vmem>>)
      %c1_i32_54 = arith.constant 1 : i32
      %83 = arith.addi %73, %c1_i32_54 : i32
      %c8_i32_55 = arith.constant 8 : i32
      %84 = arith.subi %c8_i32_55, %83 : i32
      %85 = arith.index_cast %arg0 : i32 to index
      %c1_56 = arith.constant 1 : index
      %86 = memref.load %arg3[%85, %c1_56] : memref<2x2xi32, #tpu.memory_space<smem>>
      %87 = arith.minsi %84, %86 : i32
      %c8_i32_57 = arith.constant 8 : i32
      %88 = arith.minsi %87, %c8_i32_57 : i32
      %c0_i32_58 = arith.constant 0 : i32
      %89 = arith.maxsi %88, %c0_i32_58 : i32
      %c0_i32_59 = arith.constant 0 : i32
      %90 = arith.subi %89, %c0_i32_59 : i32
      %c1_i32_60 = arith.constant 1 : i32
      %c1_i32_61 = arith.constant 1 : i32
      %91 = arith.subi %c1_i32_60, %c1_i32_61 : i32
      %92 = arith.addi %90, %91 : i32
      %c1_i32_62 = arith.constant 1 : i32
      %93 = arith.divsi %92, %c1_i32_62 : i32
      %c1_i32_63 = arith.constant 1 : i32
      %c0_i32_64 = arith.constant 0 : i32
      %c0_i32_65 = arith.constant 0 : i32
      %94 = arith.subi %93, %c0_i32_65 : i32
      %95 = arith.addi %c0_i32_65, %94 : i32
      %c1_i32_66 = arith.constant 1 : i32
      scf.for %arg10 = %c0_i32_65 to %95 step %c1_i32_66  : i32 {
        %96 = arith.muli %arg10, %c1_i32_63 : i32
        %97 = arith.addi %c0_i32_64, %96 : i32
        %c1_67 = arith.constant 1 : index
        %98 = arith.index_cast %97 : i32 to index
        %c0_68 = arith.constant 0 : index
        %99 = vector.load %arg7[%c1_67, %98, %c0_68] : memref<2x8x128xf32, #tpu.memory_space<vmem>>, vector<1x1x128xf32>
        %100 = vector.shape_cast %99 : vector<1x1x128xf32> to vector<1x128xf32>
        %101 = arith.addi %83, %97 : i32
        %c0_69 = arith.constant 0 : index
        %102 = arith.index_cast %101 : i32 to index
        %c0_70 = arith.constant 0 : index
        %103 = vector.load %arg6[%c0_69, %102, %c0_70] : memref<1x8x128xf32, #tpu.memory_space<vmem>>, vector<1x1x128xf32>
        %104 = vector.shape_cast %103 : vector<1x1x128xf32> to vector<1x128xf32>
        %105 = vector.shape_cast %100 : vector<1x128xf32> to vector<1x1x128xf32>
        tpu.vector_store %arg6[%c0_69, %102, %c0_70], %105 {strides = array<i32>} : memref<1x8x128xf32, #tpu.memory_space<vmem>>, vector<1x1x128xf32>,
      }
    } else {
    }
    return
  }
  func.func @transform_2(%arg0: i32, %arg1: memref<2x8xi32, #tpu.memory_space<smem>>, %arg2: memref<2x2xi32, #tpu.memory_space<smem>>, %arg3: memref<2x2xi32, #tpu.memory_space<smem>>) -> (i32, i32, i32) {
    %c0_i32 = arith.constant 0 : i32
    %c0_i32_0 = arith.constant 0 : i32
    %c0_i32_1 = arith.constant 0 : i32
    return %arg0, %c0_i32, %c0_i32_0 : i32, i32, i32
  }
}

</mosaic_0001>

<llo_original>
// kernel: tpu_custom_call.1
$region0: #{tpu_custom_call.1}
  #allocation0 [shape = 'u32[]', space=smem, size = 0x4, offset = 0x4, fixed_abs, tag = 'smem constant byte address 0x4 - core index']
  #allocation1 [shape = 'u32[144,128]{1,0:T(1,128)}', space=vmem, size = 0x12000, scoped, tag = 'internal scratch']
  #allocation2 [shape = 'f32[2,8,128]{2,1,0:T(8,128)}', space=vmem, size = 0x2000, scoped, tag = 'scratch operand']
  #allocation3 [shape = 's32[8]{0}', space=sflag, size = 0x20, scoped, tag = 'scratch operand']
  #allocation4 [shape = 's32[2]{0}', space=sflag, size = 0x8, scoped, tag = 'scratch operand']
  #allocation5 [shape = 's32[1]{0}', space=sflag, size = 0x4, scoped, tag = 'scoped memory for tpu_custom_call.1']
  #allocation6 [shape = 'u8[1024]{0}', space=smem, size = 0x400, scoped, tag = 'prefetched SMEM operand 0']
  #allocation7 [shape = 'u8[1024]{0}', space=smem, size = 0x400, scoped, tag = 'prefetched SMEM operand 1']
  #allocation8 [shape = 'u8[1024]{0}', space=smem, size = 0x400, scoped, tag = 'prefetched SMEM operand 2']
  #allocation11 [shape = 's32[]', space=sflag, size = 0x4, offset = 0, fixed_abs, tag = 'sflag constant byte address 0x0 - dummy sync flag']
  #allocation12 [shape = 's32[]', space=sflag, size = 0x4, offset = 0, fixed_abs, tag = 'sflag constant byte address 0x0 - dummy sync flag']
  #allocation13 [shape = 'u32[]', space=smem, size = 0x4, offset = 0x44, fixed_abs, tag = 'smem constant byte address 0x44 - assertion arg 0']
  #allocation14 [shape = 'u32[]', space=smem, size = 0x4, offset = 0x48, fixed_abs, tag = 'smem constant byte address 0x48 - assertion arg 1']
  #allocation15 [shape = 's32[]', space=sflag, size = 0x4, offset = 0, fixed_abs, tag = 'sflag constant byte address 0x0 - dummy sync flag']
  #allocation16 [shape = 's32[]', space=sflag, size = 0x4, offset = 0, fixed_abs, tag = 'sflag constant byte address 0x0 - dummy sync flag']
  #allocation17 [shape = 's32[]', space=sflag, size = 0x4, offset = 0, fixed_abs, tag = 'sflag constant byte address 0x0 - dummy sync flag']
  #allocation18 [shape = 's32[]', space=sflag, size = 0x4, offset = 0, fixed_abs, tag = 'sflag constant byte address 0x0 - dummy sync flag']
  #allocation19 [shape = 's32[]', space=sflag, size = 0x4, offset = 0, fixed_abs, tag = 'sflag constant byte address 0x0 - dummy sync flag']
  #allocation20 [shape = 's32[]', space=sflag, size = 0x4, offset = 0, fixed_abs, tag = 'sflag constant byte address 0x0 - dummy sync flag']
  #allocation21 [shape = 's32[]', space=sflag, size = 0x4, offset = 0, fixed_abs, tag = 'sflag constant byte address 0x0 - dummy sync flag']
  #allocation22 [shape = 's32[]', space=sflag, size = 0x4, offset = 0, fixed_abs, tag = 'sflag constant byte address 0x0 - dummy sync flag']
  #allocation23 [shape = 's32[]', space=sflag, size = 0x4, offset = 0, fixed_abs, tag = 'sflag constant byte address 0x0 - dummy sync flag']
  #allocation24 [shape = 's32[]', space=sflag, size = 0x4, offset = 0, fixed_abs, tag = 'sflag constant byte address 0x0 - dummy sync flag']
  #allocation25 [shape = 's32[]', space=sflag, size = 0x4, offset = 0, fixed_abs, tag = 'sflag constant byte address 0x0 - dummy sync flag']
  #allocation26 [shape = 's32[]', space=sflag, size = 0x4, offset = 0, fixed_abs, tag = 'sflag constant byte address 0x0 - dummy sync flag']
  #allocation27 [shape = 's32[]', space=sflag, size = 0x4, offset = 0, fixed_abs, tag = 'sflag constant byte address 0x0 - dummy sync flag']
  #allocation28 [shape = 's32[]', space=sflag, size = 0x4, offset = 0, fixed_abs, tag = 'sflag constant byte address 0x0 - dummy sync flag']
  #allocation29 [shape = 's32[]', space=sflag, size = 0x4, offset = 0, fixed_abs, tag = 'sflag constant byte address 0x0 - dummy sync flag']
  #allocation30 [shape = 's32[]', space=sflag, size = 0x4, offset = 0, fixed_abs, tag = 'sflag constant byte address 0x0 - dummy sync flag']
  #allocation31 [shape = 's32[]', space=sflag, size = 0x4, offset = 0, fixed_abs, tag = 'sflag constant byte address 0x0 - dummy sync flag']
  #allocation32 [shape = 's32[]', space=sflag, size = 0x4, offset = 0, fixed_abs, tag = 'sflag constant byte address 0x0 - dummy sync flag']
  #allocation33 [shape = 's32[]', space=sflag, size = 0x4, offset = 0, fixed_abs, tag = 'sflag constant byte address 0x0 - dummy sync flag']
  #allocation34 [shape = 's32[]', space=sflag, size = 0x4, offset = 0, fixed_abs, tag = 'sflag constant byte address 0x0 - dummy sync flag']
  %s0 = inlined_call_operand.hbm [shape: s32[2,8], index: 0, kind: input, shape index: {}]
  %s1 = inlined_call_operand.vmem [shape: s32[2,2], index: 1, kind: input, shape index: {}]
  %s2 = inlined_call_operand.vmem [shape: s32[2,2], index: 2, kind: input, shape index: {}]
  %s3 = inlined_call_operand.hbm [shape: f32[64,128], index: 3, kind: input, shape index: {}]
  %s4 = inlined_call_operand.hbm [shape: f32[2,2,8,128], index: 4, kind: input, shape index: {}]
  %s5 = inlined_call_operand.hbm [shape: f32[2,8,128], index: 5, kind: output, shape index: {}]
  %s6 = sld [smem:[#allocation0]]
  $region110: #{tpu_custom_call.1} parent=0
    _
  %s8 = ssub.s32 1, %s6
  %s9 = scalar_select 0, %s8, %s6
  %11 = dma.hbm_to_smem %s0, 32, [#allocation6], [#allocation5]
  %s12 = sshll.u32 %s1, 4
  %s13 = int_to_ptr.vmem [resolvable:$true] %s12
  %15 = dma.vmem_to_smem %s13, 32, [#allocation7], [#allocation5]
  %s16 = sshll.u32 %s2, 4
  %s17 = int_to_ptr.vmem [resolvable:$true] %s16
  %19 = dma.vmem_to_smem %s17, 32, [#allocation8], [#allocation5]
  %20 = dma.done [#allocation5], 96
  %21 = sfence
  $region1: #{tpu_custom_call.1} parent=0
    #allocation9 [shape = 'u8[8192]{0}', space=vmem, size = 0x2000, scoped, tag = 'output window, operand 0']
    #allocation10 [shape = 's32[2]{0}', space=sflag, size = 0x8, scoped, tag = 'scoped memory for tpu_custom_call.1']
    %22 = vsyncpa [#allocation10], 0
    %s23 = scalar_lea.sflag [#allocation10], 1
    %24 = vsyncpa %s23, 0
    loop: start=0, step=1, limit=3
    $region2: #{tpu_custom_call.1} parent=1 // loop_pre_header
      _
    $region3: #{tpu_custom_call.1} parent=1 // loop_header
      %s26 = sphi 0, %s30
      %p27 = scmp.ge.s32.totalorder %s26, 3
      %s35 = sphi 0, %s37
      %s38 = sphi 0, %s35
      %s48 = sphi 0, %s38
    $region4: #{tpu_custom_call.1} parent=1 // loop_header_branch
      %29 = sbr.rel (%p27) target = $region8
    $region5: #{tpu_custom_call.1} parent=1 // loop_body
      %s31 = ssub.s32 %s26, 1
      %s32 = sadd.s32 %s26, 1
      %s33 = ssub.s32 %s26, %s32
      %p34 = scmp.eq.s32.totalorder %s33, 0
      %s36 = sadd.s32 %s35, 1
      %s37 = scalar_select %p34, %s35, %s36
      %p39 = pneg %p34
      %p40 = scmp.eq.s32.totalorder %s26, 1
      %p41 = por %p39, %p40
      %p42 = scmp.ne.s32.totalorder %s35, %s38
      %p43 = scmp.eq.s32.totalorder %s26, 0
      %p44 = por %p42, %p43
      %p45 = scmp.ne.s32.totalorder %s35, %s38
      %p46 = scmp.eq.s32.totalorder %s31, 1
      %p47 = por %p45, %p46
      %p49 = scmp.ne.s32.totalorder %s38, %s48
      %p50 = scmp.eq.s32.totalorder %s31, 0
      %p51 = por %p49, %p50
      %p52 = scmp.lt.s32.totalorder %s26, 2
      // Predicated region
      $region9: #{tpu_custom_call.1} parent=5 // pred_check
        %p53 = pneg %p52
      $region10: #{tpu_custom_call.1} parent=5 // pred_check_branch
        %55 = sbr.rel (%p53) target = $region12
      $region11: #{tpu_custom_call.1} parent=5 // pred_region
        %p56 = pneg %p44
        %p57 = pneg %p41
        %s58 = sand.u32 %s35, 1
        %s59 = scalar_lea.sflag [#allocation10], %s58
        %s60 = sand.u32 %s35, 1
        %s61 = smul.addr %s60, 8
        %s62 = scalar_lea.vmem [#allocation9], %s61
        %s63 = smul.u32 %s26, 128
        %s64 = sld [smem:[#allocation6 + %s63]]
        %s65 = smul.addr %s64, 16
        %s66 = scalar_lea.hbm %s3, %s65
        // Predicated region
        $region13: #{tpu_custom_call.1} parent=11 // pred_check
          _
        $region14: #{tpu_custom_call.1} parent=11 // pred_check_branch
          %68 = sbr.rel target = $region16
        $region15: #{tpu_custom_call.1} parent=11 // pred_region
          %69 = sst [smem:[#allocation13]] [#allocation12]
          %70 = sst [smem:[#allocation14]] [#allocation11]
        $region16: #{tpu_custom_call.1} parent=11 // pred_fallthru
          _
        %72 = shalt.err (0)
        %s74 = sshll.u32 %s62, 4
        %s75 = int_to_ptr.vmem [resolvable:$true] %s74
        %77 = dma.hbm_to_vmem [thread:$0]  %s66, 16, %s75, [#allocation3]
        %s78 = sadd.s32 %s63, 1
        %s79 = sld [smem:[#allocation6 + %s78]]
        %s80 = smul.addr %s79, 16
        %s81 = scalar_lea.hbm %s3, %s80
        %s82 = scalar_lea.vmem %s62, 1 [#allocation9]
        %s83 = scalar_lea.sflag [#allocation3], 1
        // Predicated region
        $region17: #{tpu_custom_call.1} parent=11 // pred_check
          _
        $region18: #{tpu_custom_call.1} parent=11 // pred_check_branch
          %85 = sbr.rel target = $region20
        $region19: #{tpu_custom_call.1} parent=11 // pred_region
          %86 = sst [smem:[#allocation13]] [#allocation16]
          %87 = sst [smem:[#allocation14]] [#allocation15]
        $region20: #{tpu_custom_call.1} parent=11 // pred_fallthru
          _
        %89 = shalt.err (0)
        %s91 = sshll.u32 %s82, 4
        %s92 = int_to_ptr.vmem [resolvable:$true] %s91
        %94 = dma.hbm_to_vmem [thread:$0]  %s81, 16, %s92, %s83
        %s95 = sadd.s32 %s63, 2
        %s96 = sld [smem:[#allocation6 + %s95]]
        %s97 = smul.addr %s96, 16
        %s98 = scalar_lea.hbm %s3, %s97
        %s99 = scalar_lea.vmem %s62, 2 [#allocation9]
        %s100 = scalar_lea.sflag [#allocation3], 2
        // Predicated region
        $region21: #{tpu_custom_call.1} parent=11 // pred_check
          _
        $region22: #{tpu_custom_call.1} parent=11 // pred_check_branch
          %102 = sbr.rel target = $region24
        $region23: #{tpu_custom_call.1} parent=11 // pred_region
          %103 = sst [smem:[#allocation13]] [#allocation18]
          %104 = sst [smem:[#allocation14]] [#allocation17]
        $region24: #{tpu_custom_call.1} parent=11 // pred_fallthru
          _
        %106 = shalt.err (0)
        %s108 = sshll.u32 %s99, 4
        %s109 = int_to_ptr.vmem [resolvable:$true] %s108
        %111 = dma.hbm_to_vmem [thread:$0]  %s98, 16, %s109, %s100
        %s112 = sadd.s32 %s63, 3
        %s113 = sld [smem:[#allocation6 + %s112]]
        %s114 = smul.addr %s113, 16
        %s115 = scalar_lea.hbm %s3, %s114
        %s116 = scalar_lea.vmem %s62, 3 [#allocation9]
        %s117 = scalar_lea.sflag [#allocation3], 3
        // Predicated region
        $region25: #{tpu_custom_call.1} parent=11 // pred_check
          _
        $region26: #{tpu_custom_call.1} parent=11 // pred_check_branch
          %119 = sbr.rel target = $region28
        $region27: #{tpu_custom_call.1} parent=11 // pred_region
          %120 = sst [smem:[#allocation13]] [#allocation20]
          %121 = sst [smem:[#allocation14]] [#allocation19]
        $region28: #{tpu_custom_call.1} parent=11 // pred_fallthru
          _
        %123 = shalt.err (0)
        %s125 = sshll.u32 %s116, 4
        %s126 = int_to_ptr.vmem [resolvable:$true] %s125
        %128 = dma.hbm_to_vmem [thread:$0]  %s115, 16, %s126, %s117
        %s129 = sadd.s32 %s63, 4
        %s130 = sld [smem:[#allocation6 + %s129]]
        %s131 = smul.addr %s130, 16
        %s132 = scalar_lea.hbm %s3, %s131
        %s133 = scalar_lea.vmem %s62, 4 [#allocation9]
        %s134 = scalar_lea.sflag [#allocation3], 4
        // Predicated region
        $region29: #{tpu_custom_call.1} parent=11 // pred_check
          _
        $region30: #{tpu_custom_call.1} parent=11 // pred_check_branch
          %136 = sbr.rel target = $region32
        $region31: #{tpu_custom_call.1} parent=11 // pred_region
          %137 = sst [smem:[#allocation13]] [#allocation22]
          %138 = sst [smem:[#allocation14]] [#allocation21]
        $region32: #{tpu_custom_call.1} parent=11 // pred_fallthru
          _
        %140 = shalt.err (0)
        %s142 = sshll.u32 %s133, 4
        %s143 = int_to_ptr.vmem [resolvable:$true] %s142
        %145 = dma.hbm_to_vmem [thread:$0]  %s132, 16, %s143, %s134
        %s146 = sadd.s32 %s63, 5
        %s147 = sld [smem:[#allocation6 + %s146]]
        %s148 = smul.addr %s147, 16
        %s149 = scalar_lea.hbm %s3, %s148
        %s150 = scalar_lea.vmem %s62, 5 [#allocation9]
        %s151 = scalar_lea.sflag [#allocation3], 5
        // Predicated region
        $region33: #{tpu_custom_call.1} parent=11 // pred_check
          _
        $region34: #{tpu_custom_call.1} parent=11 // pred_check_branch
          %153 = sbr.rel target = $region36
        $region35: #{tpu_custom_call.1} parent=11 // pred_region
          %154 = sst [smem:[#allocation13]] [#allocation24]
          %155 = sst [smem:[#allocation14]] [#allocation23]
        $region36: #{tpu_custom_call.1} parent=11 // pred_fallthru
          _
        %157 = shalt.err (0)
        %s159 = sshll.u32 %s150, 4
        %s160 = int_to_ptr.vmem [resolvable:$true] %s159
        %162 = dma.hbm_to_vmem [thread:$0]  %s149, 16, %s160, %s151
        %s163 = sadd.s32 %s63, 6
        %s164 = sld [smem:[#allocation6 + %s163]]
        %s165 = smul.addr %s164, 16
        %s166 = scalar_lea.hbm %s3, %s165
        %s167 = scalar_lea.vmem %s62, 6 [#allocation9]
        %s168 = scalar_lea.sflag [#allocation3], 6
        // Predicated region
        $region37: #{tpu_custom_call.1} parent=11 // pred_check
          _
        $region38: #{tpu_custom_call.1} parent=11 // pred_check_branch
          %170 = sbr.rel target = $region40
        $region39: #{tpu_custom_call.1} parent=11 // pred_region
          %171 = sst [smem:[#allocation13]] [#allocation26]
          %172 = sst [smem:[#allocation14]] [#allocation25]
        $region40: #{tpu_custom_call.1} parent=11 // pred_fallthru
          _
        %174 = shalt.err (0)
        %s176 = sshll.u32 %s167, 4
        %s177 = int_to_ptr.vmem [resolvable:$true] %s176
        %179 = dma.hbm_to_vmem [thread:$0]  %s166, 16, %s177, %s168
        %s180 = sadd.s32 %s63, 7
        %s181 = sld [smem:[#allocation6 + %s180]]
        %s182 = smul.addr %s181, 16
        %s183 = scalar_lea.hbm %s3, %s182
        %s184 = scalar_lea.vmem %s62, 7 [#allocation9]
        %s185 = scalar_lea.sflag [#allocation3], 7
        // Predicated region
        $region41: #{tpu_custom_call.1} parent=11 // pred_check
          _
        $region42: #{tpu_custom_call.1} parent=11 // pred_check_branch
          %187 = sbr.rel target = $region44
        $region43: #{tpu_custom_call.1} parent=11 // pred_region
          %188 = sst [smem:[#allocation13]] [#allocation28]
          %189 = sst [smem:[#allocation14]] [#allocation27]
        $region44: #{tpu_custom_call.1} parent=11 // pred_fallthru
          _
        %191 = shalt.err (0)
        %s193 = sshll.u32 %s184, 4
        %s194 = int_to_ptr.vmem [resolvable:$true] %s193
        %196 = dma.hbm_to_vmem [thread:$0]  %s183, 16, %s194, %s185
        %s197 = sld [smem:[#allocation7 + %s63]]
        %p198 = scmp.ge.s32.totalorder %s197, 0
        // Predicated region
        $region45: #{tpu_custom_call.1} parent=11 // pred_check
          %p199 = pneg %p198
        $region46: #{tpu_custom_call.1} parent=11 // pred_check_branch
          %201 = sbr.rel (%p199) target = $region48
        $region47: #{tpu_custom_call.1} parent=11 // pred_region
          %s202 = smul.u32 %s26, 16
          %s203 = smul.addr %s202, 16
          %s204 = scalar_lea.hbm %s4, %s203
          // Predicated region
          $region49: #{tpu_custom_call.1} parent=47 // pred_check
            _
          $region50: #{tpu_custom_call.1} parent=47 // pred_check_branch
            %206 = sbr.rel target = $region52
          $region51: #{tpu_custom_call.1} parent=47 // pred_region
            %207 = sst [smem:[#allocation13]] [#allocation30]
            %208 = sst [smem:[#allocation14]] [#allocation29]
          $region52: #{tpu_custom_call.1} parent=47 // pred_fallthru
            _
          %210 = shalt.err (0)
          %s212 = sshll.u32 [#allocation2], 4
          %s213 = int_to_ptr.vmem [resolvable:$true] %s212
          %215 = dma.hbm_to_vmem [thread:$0]  %s204, 128, %s213, [#allocation4]
        $region48: #{tpu_custom_call.1} parent=11 // pred_fallthru
          _
        %s216 = sld [smem:[#allocation7 + %s78]]
        %p217 = scmp.ge.s32.totalorder %s216, 0
        // Predicated region
        $region53: #{tpu_custom_call.1} parent=11 // pred_check
          %p218 = pneg %p217
        $region54: #{tpu_custom_call.1} parent=11 // pred_check_branch
          %220 = sbr.rel (%p218) target = $region56
        $region55: #{tpu_custom_call.1} parent=11 // pred_region
          %s221 = smul.u32 %s26, 16
          %s222 = sadd.s32 8, %s221
          %s223 = smul.addr %s222, 16
          %s224 = scalar_lea.hbm %s4, %s223
          %s225 = scalar_lea.vmem [#allocation2], 8
          %s226 = scalar_lea.sflag [#allocation4], 1
          // Predicated region
          $region57: #{tpu_custom_call.1} parent=55 // pred_check
            _
          $region58: #{tpu_custom_call.1} parent=55 // pred_check_branch
            %228 = sbr.rel target = $region60
          $region59: #{tpu_custom_call.1} parent=55 // pred_region
            %229 = sst [smem:[#allocation13]] [#allocation32]
            %230 = sst [smem:[#allocation14]] [#allocation31]
          $region60: #{tpu_custom_call.1} parent=55 // pred_fallthru
            _
          %232 = shalt.err (0)
          %s234 = sshll.u32 %s225, 4
          %s235 = int_to_ptr.vmem [resolvable:$true] %s234
          %237 = dma.hbm_to_vmem [thread:$0]  %s224, 128, %s235, %s226
        $region56: #{tpu_custom_call.1} parent=11 // pred_fallthru
          _
        loop: start=0, step=1, limit=8
        $region61: #{tpu_custom_call.1} parent=11 // loop_pre_header
          _
        $region62: #{tpu_custom_call.1} parent=11 // loop_header
          %s239 = sphi 0, %s243
          %p240 = scmp.ge.s32.totalorder %s239, 8
        $region63: #{tpu_custom_call.1} parent=11 // loop_header_branch
          %242 = sbr.rel (%p240) target = $region67
        $region64: #{tpu_custom_call.1} parent=11 // loop_body
          %s244 = sand.u32 %s239, 7
          %s245 = sadd.s32 %s239, 8
          %p246 = scmp.lt.s32.totalorder %s245, 7
          %s247 = scalar_select %p246, %s245, 7
          %s248 = sshra.s32 %s247, 7
          %s249 = sand.u32 %s247, 127
          %s250 = sadd.s32 %s248, %s26
          %s251 = smul.u32 %s250, 128
          %s252 = sshra.s32 %s247, 7
          %s253 = sand.u32 %s247, 127
          %s254 = sadd.s32 %s251, %s253
          %s255 = sld [smem:[#allocation6 + %s254]]
          %s256 = sshra.s32 %s239, 7
          %s257 = sand.u32 %s239, 127
          %s258 = sadd.s32 %s256, %s26
          %s259 = smul.u32 %s258, 128
          %s260 = sshra.s32 %s239, 7
          %s261 = sand.u32 %s239, 127
          %s262 = sadd.s32 %s259, %s261
          %s263 = sld [smem:[#allocation6 + %s262]]
          %s264 = scalar_lea.sflag [#allocation3], %s244
          %s265 = smul.u32 1, 1
          %s266 = sshll.u32 %s265, 4
          %267 = dma.done %s264, %s266
          %p268 = scmp.lt.s32.totalorder %s245, 8
          // Predicated region
          $region68: #{tpu_custom_call.1} parent=64 // pred_check
            %p269 = pneg %p268
          $region69: #{tpu_custom_call.1} parent=64 // pred_check_branch
            %271 = sbr.rel (%p269) target = $region71
          $region70: #{tpu_custom_call.1} parent=64 // pred_region
            %s272 = smul.addr %s255, 16
            %s273 = scalar_lea.hbm %s3, %s272
            %s274 = scalar_lea.vmem %s62, %s245 [#allocation9]
            // Predicated region
            $region72: #{tpu_custom_call.1} parent=70 // pred_check
              _
            $region73: #{tpu_custom_call.1} parent=70 // pred_check_branch
              %276 = sbr.rel target = $region75
            $region74: #{tpu_custom_call.1} parent=70 // pred_region
              %277 = sst [smem:[#allocation13]] [#allocation34]
              %278 = sst [smem:[#allocation14]] [#allocation33]
            $region75: #{tpu_custom_call.1} parent=70 // pred_fallthru
              _
            %280 = shalt.err (0)
            %s282 = sshll.u32 %s274, 4
            %s283 = int_to_ptr.vmem [resolvable:$true] %s282
            %285 = dma.hbm_to_vmem [thread:$0]  %s273, 16, %s283, %s264
          $region71: #{tpu_custom_call.1} parent=64 // pred_fallthru
            _
        $region65: #{tpu_custom_call.1} parent=11 // loop_footer
          %s243 = sadd.s32 1, %s239
        $region66: #{tpu_custom_call.1} parent=11 // loop_footer_branch
          %238 = sbr.rel target = $region62
        $region67: #{tpu_custom_call.1} parent=11 // loop_exit
          _
        %s286 = sld [smem:[#allocation7 + %s63]]
        %p287 = scmp.ge.s32.totalorder %s286, 0
        // Predicated region
        $region76: #{tpu_custom_call.1} parent=11 // pred_check
          %p288 = pneg %p287
        $region77: #{tpu_custom_call.1} parent=11 // pred_check_branch
          %290 = sbr.rel (%p288) target = $region79
        $region78: #{tpu_custom_call.1} parent=11 // pred_region
          %s291 = smul.u32 8, 1
          %s292 = sshll.u32 %s291, 4
          %293 = dma.done [#allocation4], %s292
          %s294 = sadd.s32 %s286, 1
          %s295 = ssub.s32 7, %s286
          %s296 = sld [smem:[#allocation8 + %s63]]
          %p297 = scmp.lt.s32.totalorder %s295, %s296
          %s298 = scalar_select %p297, %s295, %s296
          %p299 = scmp.lt.s32.totalorder %s298, 8
          %s300 = scalar_select %p299, %s298, 8
          %p301 = scmp.gt.s32.totalorder %s300, 0
          %s302 = scalar_select %p301, %s300, 0
          // While loop
          $region80: #{tpu_custom_call.1} parent=78 // loop_pre_header
            _
          $region81: #{tpu_custom_call.1} parent=78 // loop_header
            %s304 = sphi 0, %s306
            %p305 = scmp.ge.s32.totalorder %s304, %s302
          $region82: #{tpu_custom_call.1} parent=78 // loop_header_branch
            %308 = sbr.rel (%p305) target = $region86
          $region83: #{tpu_custom_call.1} parent=78 // loop_body
            %s309 = scalar_lea.vmem [#allocation2], %s304
            %v310 = vld [vmem:[%s309] sm:$0x1]
            %s311 = sadd.s32 %s294, %s304
            %s312 = scalar_lea.vmem %s62, %s311 [#allocation9]
            %313 = vst [vmem:[%s312] sm:$0x1] %v310
          $region84: #{tpu_custom_call.1} parent=78 // loop_footer
            %s306 = sadd.s32 %s304, 1
          $region85: #{tpu_custom_call.1} parent=78 // loop_footer_branch
            %303 = sbr.rel target = $region81
          $region86: #{tpu_custom_call.1} parent=78 // loop_exit
            _
        $region79: #{tpu_custom_call.1} parent=11 // pred_fallthru
          _
        %s314 = sld [smem:[#allocation7 + %s78]]
        %p315 = scmp.ge.s32.totalorder %s314, 0
        // Predicated region
        $region87: #{tpu_custom_call.1} parent=11 // pred_check
          %p316 = pneg %p315
        $region88: #{tpu_custom_call.1} parent=11 // pred_check_branch
          %318 = sbr.rel (%p316) target = $region90
        $region89: #{tpu_custom_call.1} parent=11 // pred_region
          %s319 = scalar_lea.sflag [#allocation4], 1
          %s320 = smul.u32 8, 1
          %s321 = sshll.u32 %s320, 4
          %322 = dma.done %s319, %s321
          %s323 = sadd.s32 %s314, 1
          %s324 = ssub.s32 7, %s314
          %s325 = sld [smem:[#allocation8 + %s78]]
          %p326 = scmp.lt.s32.totalorder %s324, %s325
          %s327 = scalar_select %p326, %s324, %s325
          %p328 = scmp.lt.s32.totalorder %s327, 8
          %s329 = scalar_select %p328, %s327, 8
          %p330 = scmp.gt.s32.totalorder %s329, 0
          %s331 = scalar_select %p330, %s329, 0
          // While loop
          $region91: #{tpu_custom_call.1} parent=89 // loop_pre_header
            _
          $region92: #{tpu_custom_call.1} parent=89 // loop_header
            %s333 = sphi 0, %s335
            %p334 = scmp.ge.s32.totalorder %s333, %s331
          $region93: #{tpu_custom_call.1} parent=89 // loop_header_branch
            %337 = sbr.rel (%p334) target = $region97
          $region94: #{tpu_custom_call.1} parent=89 // loop_body
            %s338 = sadd.s32 %s333, 8
            %s339 = scalar_lea.vmem [#allocation2], %s338
            %v340 = vld [vmem:[%s339] sm:$0x1]
            %s341 = sadd.s32 %s323, %s333
            %s342 = scalar_lea.vmem %s62, %s341 [#allocation9]
            %343 = vst [vmem:[%s342] sm:$0x1] %v340
          $region95: #{tpu_custom_call.1} parent=89 // loop_footer
            %s335 = sadd.s32 %s333, 1
          $region96: #{tpu_custom_call.1} parent=89 // loop_footer_branch
            %332 = sbr.rel target = $region92
          $region97: #{tpu_custom_call.1} parent=89 // loop_exit
            _
        $region90: #{tpu_custom_call.1} parent=11 // pred_fallthru
          _
        %s344 = sand.u32 %s35, 1
        %s345 = scalar_lea.sflag [#allocation10], %s344
        %s346 = sand.u32 %s35, 1
        %s347 = smul.addr %s346, 8
        %s348 = scalar_lea.vmem [#allocation9], %s347
        // Predicated region
        $region98: #{tpu_custom_call.1} parent=11 // pred_check
          %p349 = pneg %p41
        $region99: #{tpu_custom_call.1} parent=11 // pred_check_branch
          %351 = sbr.rel (%p349) target = $region101
        $region100: #{tpu_custom_call.1} parent=11 // pred_region
          %s353 = ssub.s32 128, 128
          %354 = vsyncadd %s345, %s353
          %s355 = smul.addr %s26, 128
          %s356 = scalar_lea.hbm %s5, %s355
          %s358 = sshll.u32 %s348, 4
          %s359 = int_to_ptr.vmem [resolvable:$true] %s358
          %361 = dma.vmem_to_hbm [thread:$0]  %s359, 128, %s356, %s345
        $region101: #{tpu_custom_call.1} parent=11 // pred_fallthru
          _
      $region12: #{tpu_custom_call.1} parent=5 // pred_fallthru
        _
      %p362 = scmp.le.s32.totalorder 1, %s26
      // Predicated region
      $region102: #{tpu_custom_call.1} parent=5 // pred_check
        %p363 = pneg %p362
      $region103: #{tpu_custom_call.1} parent=5 // pred_check_branch
        %365 = sbr.rel (%p363) target = $region105
      $region104: #{tpu_custom_call.1} parent=5 // pred_region
        %s366 = ssub.s32 %s26, 1
        // Predicated region
        $region106: #{tpu_custom_call.1} parent=104 // pred_check
          %p367 = pneg %p47
        $region107: #{tpu_custom_call.1} parent=104 // pred_check_branch
          %369 = sbr.rel (%p367) target = $region109
        $region108: #{tpu_custom_call.1} parent=104 // pred_region
          %s370 = sand.u32 %s38, 1
          %s371 = scalar_lea.sflag [#allocation10], %s370
          %s372 = sand.u32 %s38, 1
          %s373 = smul.addr %s372, 8
          %s374 = scalar_lea.vmem [#allocation9], %s373
          %375 = dma.done %s371, 128
        $region109: #{tpu_custom_call.1} parent=104 // pred_fallthru
          _
      $region105: #{tpu_custom_call.1} parent=5 // pred_fallthru
        _
    $region6: #{tpu_custom_call.1} parent=1 // loop_footer
      %s30 = sadd.s32 1, %s26
    $region7: #{tpu_custom_call.1} parent=1 // loop_footer_branch
      %25 = sbr.rel target = $region3
    $region8: #{tpu_custom_call.1} parent=1 // loop_exit
      _
    %376 = vsyncpa [#allocation10], 1
    %s377 = scalar_lea.sflag [#allocation10], 1
    %378 = vsyncpa %s377, 1
  %379 = vsyncmov [#allocation3]
  %s380 = vpop.sfrf %379
  %p381 = scmp.eq.s32.totalorder %s380, 0
  %p382 = pneg %p381
  %384 = shalt.err (%p382)
  %s385 = scalar_lea.sflag [#allocation3], 1
  %386 = vsyncmov %s385
  %s387 = vpop.sfrf %386
  %p388 = scmp.eq.s32.totalorder %s387, 0
  %p389 = pneg %p388
  %391 = shalt.err (%p389)
  %s392 = scalar_lea.sflag [#allocation3], 2
  %393 = vsyncmov %s392
  %s394 = vpop.sfrf %393
  %p395 = scmp.eq.s32.totalorder %s394, 0
  %p396 = pneg %p395
  %398 = shalt.err (%p396)
  %s399 = scalar_lea.sflag [#allocation3], 3
  %400 = vsyncmov %s399
  %s401 = vpop.sfrf %400
  %p402 = scmp.eq.s32.totalorder %s401, 0
  %p403 = pneg %p402
  %405 = shalt.err (%p403)
  %s406 = scalar_lea.sflag [#allocation3], 4
  %407 = vsyncmov %s406
  %s408 = vpop.sfrf %407
  %p409 = scmp.eq.s32.totalorder %s408, 0
  %p410 = pneg %p409
  %412 = shalt.err (%p410)
  %s413 = scalar_lea.sflag [#allocation3], 5
  %414 = vsyncmov %s413
  %s415 = vpop.sfrf %414
  %p416 = scmp.eq.s32.totalorder %s415, 0
  %p417 = pneg %p416
  %419 = shalt.err (%p417)
  %s420 = scalar_lea.sflag [#allocation3], 6
  %421 = vsyncmov %s420
  %s422 = vpop.sfrf %421
  %p423 = scmp.eq.s32.totalorder %s422, 0
  %p424 = pneg %p423
  %426 = shalt.err (%p424)
  %s427 = scalar_lea.sflag [#allocation3], 7
  %428 = vsyncmov %s427
  %s429 = vpop.sfrf %428
  %p430 = scmp.eq.s32.totalorder %s429, 0
  %p431 = pneg %p430
  %433 = shalt.err (%p431)
  %434 = vsyncmov [#allocation4]
  %s435 = vpop.sfrf %434
  %p436 = scmp.eq.s32.totalorder %s435, 0
  %p437 = pneg %p436
  %439 = shalt.err (%p437)
  %s440 = scalar_lea.sflag [#allocation4], 1
  %441 = vsyncmov %s440
  %s442 = vpop.sfrf %441
  %p443 = scmp.eq.s32.totalorder %s442, 0
  %p444 = pneg %p443
  %446 = shalt.err (%p444)

</llo_original>
